<compile_context>
chip_gen: v6e
topology: v6e:2x2x1
jax: 0.10.0
libtpu: 0.0.40
codegen_flags: <defaults>
</compile_context>

<pallas_src>
import jax
import jax.numpy as jnp
from jax import lax
from jax.experimental import pallas as pl
from jax.experimental.pallas import tpu as pltpu


# "A @ B^T" dimension numbers (contract lhs dim 1 with rhs dim 1) -- the same
# NT pattern the reference flash-attention TPU kernel uses, natively supported
# by the MXU lowering.
_NT_DIMS = (((1,), (1,)), ((), ()))

_MAX_X_TILE_BYTES = 4 * 1024 * 1024   # per input buffer (x is double-buffered)


def _round_up(x, m):
    return (x + m - 1) // m * m


def _mlp_kernel(x_ref,
                w1_ref, b1_ref,
                w2_ref, b2_ref,
                w3_ref, b3_ref,
                w4_ref, b4_ref,
                o_ref):
    """One batch tile.  All activations are (features, batch_tile)."""
    x = x_ref[...]                                    # (tb, in) f32

    # fc1 + ReLU: (36, in) @ (tb, in)^T -> (36, tb)
    h = lax.dot_general(w1_ref[...], x, _NT_DIMS,
                        preferred_element_type=jnp.float32) + b1_ref[...]
    h = jnp.maximum(h, 0.0)

    # fc2 + ReLU: (36, 36) @ (36, tb) -> (36, tb)
    h = jnp.dot(w2_ref[...], h, preferred_element_type=jnp.float32) + b2_ref[...]
    h = jnp.maximum(h, 0.0)

    # fc3 + ReLU: (18, 36) @ (36, tb) -> (18, tb)
    h = jnp.dot(w3_ref[...], h, preferred_element_type=jnp.float32) + b3_ref[...]
    h = jnp.maximum(h, 0.0)

    # fc4 + Sigmoid: (1, 18) @ (18, tb) -> (1, tb), lane-dense output.
    z = jnp.dot(w4_ref[...], h, preferred_element_type=jnp.float32) + b4_ref[...]
    # exp(-z) overflows to +inf only for very negative z, where 1/inf == 0 is
    # exactly the correct fp32 saturation of sigmoid.
    sig = 1.0 / (1.0 + jnp.exp(-z))
    o_ref[...] = sig.reshape(o_ref.shape).astype(o_ref.dtype)


def accident_prediction_forward(x, params, *, batch_tile=512):
    """x: (B, input_size) float32.
    params: PyTorch-layout weights w_i (out, in), biases b_i (out, 1).
    batch_tile: rows per grid step (primary tuning knob; sweep 256-1024)."""
    B, input_size = x.shape
    w1, b1 = params["w1"], params["b1"]
    w2, b2 = params["w2"], params["b2"]
    w3, b3 = params["w3"], params["b3"]
    w4, b4 = params["w4"], params["b4"]

    # --- batch-tile selection ------------------------------------------------
    # Multiple of 128 so the (1, tb) output block is fully lane-dense and x
    # tiles are (8,128)-aligned; capped so the double-buffered x tile stays
    # well inside scoped VMEM on every TPU generation (v7x: 64 MiB physical).
    tb = _round_up(min(batch_tile, _round_up(B, 128)), 128)
    bytes_per_row = input_size * 4
    max_rows = max(128, (_MAX_X_TILE_BYTES // bytes_per_row) // 128 * 128)
    tb = min(tb, max_rows)

    B_pad = _round_up(B, tb)
    num_tiles = B_pad // tb
    if B_pad != B:
        x = jnp.pad(x, ((0, B_pad - B), (0, 0)))   # padded rows are sliced off below

    def rep_spec(arr):
        # Whole-array block with a constant index map: Pallas keeps it resident
        # in VMEM and does not re-copy it across grid steps.
        n = arr.ndim
        return pl.BlockSpec(arr.shape, lambda i: (0,) * n)

    out = pl.pallas_call(
        _mlp_kernel,
        out_shape=jax.ShapeDtypeStruct((num_tiles, 1, tb), jnp.float32),
        grid=(num_tiles,),
        in_specs=[
            pl.BlockSpec((tb, input_size), lambda i: (i, 0)),   # x tile
            rep_spec(w1), rep_spec(b1),
            rep_spec(w2), rep_spec(b2),
            rep_spec(w3), rep_spec(b3),
            rep_spec(w4), rep_spec(b4),
        ],
        out_specs=pl.BlockSpec((1, 1, tb), lambda i: (i, 0, 0)),
        compiler_params=pltpu.CompilerParams(
            dimension_semantics=("parallel",)),     # shards batch across v7x's 2 TCs
    )(x, w1, b1, w2, b2, w3, b3, w4, b4)

    # (num_tiles, 1, tb) row-major == batch order; drop padding, restore (B, 1).
    return out.reshape(B_pad, 1)[:B]


def init_params(key, input_size):
    """Deterministic init mirroring nn.Linear defaults, PyTorch (out, in) layout."""
    dims = [(36, input_size), (36, 36), (18, 36), (1, 18)]
    params = {}
    for idx, (fan_out, fan_in) in enumerate(dims, start=1):
        key, kw, kb = jax.random.split(key, 3)
        bound = 1.0 / jnp.sqrt(jnp.float32(fan_in))
        params[f"w{idx}"] = jax.random.uniform(
            kw, (fan_out, fan_in), jnp.float32, -bound, bound)
        params[f"b{idx}"] = jax.random.uniform(
            kb, (fan_out, 1), jnp.float32, -bound, bound)
    return params


def _reference_forward(x, params):
    h = jnp.maximum(x @ params["w1"].T + params["b1"].T, 0.0)
    h = jnp.maximum(h @ params["w2"].T + params["b2"].T, 0.0)
    h = jnp.maximum(h @ params["w3"].T + params["b3"].T, 0.0)
    return jax.nn.sigmoid(h @ params["w4"].T + params["b4"].T)


if __name__ == "__main__":
    key = jax.random.PRNGKey(0)
    k_params, k_x1, k_x2 = jax.random.split(key, 3)

    input_size = 32
    params = init_params(k_params, input_size)

    # Small case: B=8 -> single 128-row tile (padded), one grid step.
    x_small = jax.random.normal(k_x1, (8, input_size), jnp.float32)
    out_small = jax.block_until_ready(accident_prediction_forward(x_small, params))
    ref_small = _reference_forward(x_small, params)
    assert out_small.shape == (8, 1)
    assert jnp.allclose(out_small, ref_small, atol=1e-5, rtol=1e-5), "small-batch mismatch"

    # Ragged multi-tile case: B=200 with batch_tile=128 -> 2 grid steps + padding.
    x_big = jax.random.normal(k_x2, (200, input_size), jnp.float32)
    out_big = jax.block_until_ready(
        accident_prediction_forward(x_big, params, batch_tile=128))
    ref_big = _reference_forward(x_big, params)
    assert out_big.shape == (200, 1)
    assert jnp.allclose(out_big, ref_big, atol=1e-5, rtol=1e-5), "multi-tile mismatch"

    print("KERNEL_OK")
</pallas_src>

<mosaic_0001>
module attributes {stable_mosaic.version = 11 : i64} {
  func.func @_mlp_kernel(%arg0: i32, %arg1: memref<128x32xf32, #tpu.memory_space<vmem>>, %arg2: memref<36x32xf32, #tpu.memory_space<vmem>>, %arg3: memref<36x1xf32, #tpu.memory_space<vmem>>, %arg4: memref<36x36xf32, #tpu.memory_space<vmem>>, %arg5: memref<36x1xf32, #tpu.memory_space<vmem>>, %arg6: memref<18x36xf32, #tpu.memory_space<vmem>>, %arg7: memref<18x1xf32, #tpu.memory_space<vmem>>, %arg8: memref<1x18xf32, #tpu.memory_space<vmem>>, %arg9: memref<1x1xf32, #tpu.memory_space<vmem>>, %arg10: memref<1x1x128xf32, #tpu.memory_space<vmem>>) attributes {dimension_semantics = [#tpu.dimension_semantics<parallel>], iteration_bounds = array<i64: 1>, scalar_prefetch = 0 : i64, scratch_operands = 0 : i64, tpu.core_type = #tpu.core_type<tc>, window_params = [{transform_indices = @transform_0, window_bounds = array<i64: 128, 32>}, {pipeline_mode = #tpu.pipeline_mode<synchronous>, transform_indices = @transform_1, window_bounds = array<i64: 36, 32>}, {pipeline_mode = #tpu.pipeline_mode<synchronous>, transform_indices = @transform_2, window_bounds = array<i64: 36, 1>}, {pipeline_mode = #tpu.pipeline_mode<synchronous>, transform_indices = @transform_3, window_bounds = array<i64: 36, 36>}, {pipeline_mode = #tpu.pipeline_mode<synchronous>, transform_indices = @transform_4, window_bounds = array<i64: 36, 1>}, {pipeline_mode = #tpu.pipeline_mode<synchronous>, transform_indices = @transform_5, window_bounds = array<i64: 18, 36>}, {pipeline_mode = #tpu.pipeline_mode<synchronous>, transform_indices = @transform_6, window_bounds = array<i64: 18, 1>}, {pipeline_mode = #tpu.pipeline_mode<synchronous>, transform_indices = @transform_7, window_bounds = array<i64: 1, 18>}, {pipeline_mode = #tpu.pipeline_mode<synchronous>, transform_indices = @transform_8, window_bounds = array<i64: 1, 1>}, {transform_indices = @transform_9, window_bounds = array<i64: 1, 1, 128>}]} {
    %c0 = arith.constant 0 : index
    %c0_0 = arith.constant 0 : index
    %0 = vector.load %arg1[%c0, %c0_0] : memref<128x32xf32, #tpu.memory_space<vmem>>, vector<128x32xf32>
    %c0_1 = arith.constant 0 : index
    %c0_2 = arith.constant 0 : index
    %1 = vector.load %arg2[%c0_1, %c0_2] : memref<36x32xf32, #tpu.memory_space<vmem>>, vector<36x32xf32>
    %cst = arith.constant dense<0.000000e+00> : vector<36x128xf32>
    %2 = tpu.matmul %1, %0, %cst {dimension_numbers = #tpu.dot_dimension_numbers<[1], [1], [0], [0], [0, 0, 1, 0], [], []>} : vector<36x32xf32>, vector<128x32xf32>, vector<36x128xf32> -> vector<36x128xf32>
    %c0_3 = arith.constant 0 : index
    %c0_4 = arith.constant 0 : index
    %3 = vector.load %arg3[%c0_3, %c0_4] : memref<36x1xf32, #tpu.memory_space<vmem>>, vector<36x1xf32>
    %4 = vector.broadcast %3 : vector<36x1xf32> to vector<36x128xf32>
    %5 = arith.addf %2, %4 : vector<36x128xf32>
    %cst_5 = arith.constant 0.000000e+00 : f32
    %6 = vector.broadcast %cst_5 : f32 to vector<36x128xf32>
    %7 = arith.maximumf %5, %6 : vector<36x128xf32>
    %c0_6 = arith.constant 0 : index
    %c0_7 = arith.constant 0 : index
    %8 = vector.load %arg4[%c0_6, %c0_7] : memref<36x36xf32, #tpu.memory_space<vmem>>, vector<36x36xf32>
    %cst_8 = arith.constant dense<0.000000e+00> : vector<36x128xf32>
    %9 = tpu.matmul %8, %7, %cst_8 {dimension_numbers = #tpu.dot_dimension_numbers<[1], [0], [0], [1], [0, 0, 1, 1], [], []>} : vector<36x36xf32>, vector<36x128xf32>, vector<36x128xf32> -> vector<36x128xf32>
    %c0_9 = arith.constant 0 : index
    %c0_10 = arith.constant 0 : index
    %10 = vector.load %arg5[%c0_9, %c0_10] : memref<36x1xf32, #tpu.memory_space<vmem>>, vector<36x1xf32>
    %11 = vector.broadcast %10 : vector<36x1xf32> to vector<36x128xf32>
    %12 = arith.addf %9, %11 : vector<36x128xf32>
    %cst_11 = arith.constant 0.000000e+00 : f32
    %13 = vector.broadcast %cst_11 : f32 to vector<36x128xf32>
    %14 = arith.maximumf %12, %13 : vector<36x128xf32>
    %c0_12 = arith.constant 0 : index
    %c0_13 = arith.constant 0 : index
    %15 = vector.load %arg6[%c0_12, %c0_13] : memref<18x36xf32, #tpu.memory_space<vmem>>, vector<18x36xf32>
    %cst_14 = arith.constant dense<0.000000e+00> : vector<18x128xf32>
    %16 = tpu.matmul %15, %14, %cst_14 {dimension_numbers = #tpu.dot_dimension_numbers<[1], [0], [0], [1], [0, 0, 1, 1], [], []>} : vector<18x36xf32>, vector<36x128xf32>, vector<18x128xf32> -> vector<18x128xf32>
    %c0_15 = arith.constant 0 : index
    %c0_16 = arith.constant 0 : index
    %17 = vector.load %arg7[%c0_15, %c0_16] : memref<18x1xf32, #tpu.memory_space<vmem>>, vector<18x1xf32>
    %18 = vector.broadcast %17 : vector<18x1xf32> to vector<18x128xf32>
    %19 = arith.addf %16, %18 : vector<18x128xf32>
    %cst_17 = arith.constant 0.000000e+00 : f32
    %20 = vector.broadcast %cst_17 : f32 to vector<18x128xf32>
    %21 = arith.maximumf %19, %20 : vector<18x128xf32>
    %c0_18 = arith.constant 0 : index
    %c0_19 = arith.constant 0 : index
    %22 = vector.load %arg8[%c0_18, %c0_19] : memref<1x18xf32, #tpu.memory_space<vmem>>, vector<1x18xf32>
    %cst_20 = arith.constant dense<0.000000e+00> : vector<1x128xf32>
    %23 = tpu.matmul %22, %21, %cst_20 {dimension_numbers = #tpu.dot_dimension_numbers<[1], [0], [0], [1], [0, 0, 1, 1], [], []>} : vector<1x18xf32>, vector<18x128xf32>, vector<1x128xf32> -> vector<1x128xf32>
    %c0_21 = arith.constant 0 : index
    %c0_22 = arith.constant 0 : index
    %24 = vector.load %arg9[%c0_21, %c0_22] : memref<1x1xf32, #tpu.memory_space<vmem>>, vector<1x1xf32>
    %25 = vector.broadcast %24 : vector<1x1xf32> to vector<1x128xf32>
    %26 = arith.addf %23, %25 : vector<1x128xf32>
    %cst_23 = arith.constant 0.000000e+00 : f32
    %27 = vector.broadcast %cst_23 : f32 to vector<1x128xf32>
    %28 = arith.subf %27, %26 : vector<1x128xf32>
    %29 = math.exp %28 : vector<1x128xf32>
    %cst_24 = arith.constant 1.000000e+00 : f32
    %30 = vector.broadcast %cst_24 : f32 to vector<1x128xf32>
    %31 = arith.addf %30, %29 : vector<1x128xf32>
    %cst_25 = arith.constant 1.000000e+00 : f32
    %32 = vector.broadcast %cst_25 : f32 to vector<1x128xf32>
    %33 = arith.divf %32, %31 : vector<1x128xf32>
    %34 = vector.shape_cast %33 : vector<1x128xf32> to vector<1x1x128xf32>
    %c0_26 = arith.constant 0 : index
    %c0_27 = arith.constant 0 : index
    %c0_28 = arith.constant 0 : index
    %35 = vector.load %arg10[%c0_26, %c0_27, %c0_28] : memref<1x1x128xf32, #tpu.memory_space<vmem>>, vector<1x1x128xf32>
    tpu.vector_store %arg10[%c0_26, %c0_27, %c0_28], %34 {strides = array<i32>} : memref<1x1x128xf32, #tpu.memory_space<vmem>>, vector<1x1x128xf32>,
    return
  }
  func.func @transform_0(%arg0: i32) -> (i32, i32) {
    %c0_i32 = arith.constant 0 : i32
    %c0_i32_0 = arith.constant 0 : i32
    return %arg0, %c0_i32 : i32, i32
  }
  func.func @transform_1(%arg0: i32) -> (i32, i32) {
    %c0_i32 = arith.constant 0 : i32
    %c0_i32_0 = arith.constant 0 : i32
    %c0_i32_1 = arith.constant 0 : i32
    return %c0_i32, %c0_i32_0 : i32, i32
  }
  func.func @transform_2(%arg0: i32) -> (i32, i32) {
    %c0_i32 = arith.constant 0 : i32
    %c0_i32_0 = arith.constant 0 : i32
    %c0_i32_1 = arith.constant 0 : i32
    return %c0_i32, %c0_i32_0 : i32, i32
  }
  func.func @transform_3(%arg0: i32) -> (i32, i32) {
    %c0_i32 = arith.constant 0 : i32
    %c0_i32_0 = arith.constant 0 : i32
    %c0_i32_1 = arith.constant 0 : i32
    return %c0_i32, %c0_i32_0 : i32, i32
  }
  func.func @transform_4(%arg0: i32) -> (i32, i32) {
    %c0_i32 = arith.constant 0 : i32
    %c0_i32_0 = arith.constant 0 : i32
    %c0_i32_1 = arith.constant 0 : i32
    return %c0_i32, %c0_i32_0 : i32, i32
  }
  func.func @transform_5(%arg0: i32) -> (i32, i32) {
    %c0_i32 = arith.constant 0 : i32
    %c0_i32_0 = arith.constant 0 : i32
    %c0_i32_1 = arith.constant 0 : i32
    return %c0_i32, %c0_i32_0 : i32, i32
  }
  func.func @transform_6(%arg0: i32) -> (i32, i32) {
    %c0_i32 = arith.constant 0 : i32
    %c0_i32_0 = arith.constant 0 : i32
    %c0_i32_1 = arith.constant 0 : i32
    return %c0_i32, %c0_i32_0 : i32, i32
  }
  func.func @transform_7(%arg0: i32) -> (i32, i32) {
    %c0_i32 = arith.constant 0 : i32
    %c0_i32_0 = arith.constant 0 : i32
    %c0_i32_1 = arith.constant 0 : i32
    return %c0_i32, %c0_i32_0 : i32, i32
  }
  func.func @transform_8(%arg0: i32) -> (i32, i32) {
    %c0_i32 = arith.constant 0 : i32
    %c0_i32_0 = arith.constant 0 : i32
    %c0_i32_1 = arith.constant 0 : i32
    return %c0_i32, %c0_i32_0 : i32, i32
  }
  func.func @transform_9(%arg0: i32) -> (i32, i32, i32) {
    %c0_i32 = arith.constant 0 : i32
    %c0_i32_0 = arith.constant 0 : i32
    %c0_i32_1 = arith.constant 0 : i32
    return %arg0, %c0_i32, %c0_i32_0 : i32, i32, i32
  }
}

</mosaic_0001>

<llo_original>
// kernel: tpu_custom_call.1
$region0: #{tpu_custom_call.1}
  #allocation0 [shape = 'u32[]', space=smem, size = 0x4, offset = 0x4, fixed_abs, tag = 'smem constant byte address 0x4 - core index']
  #allocation1 [shape = 'u32[144,128]{1,0:T(1,128)}', space=vmem, size = 0x12000, scoped, tag = 'internal scratch']
  #allocation2 [shape = 'f32[1,1]{1,0:T(1,128)S(1)}', space=vmem, size = 0x200, scoped, tag = 'scoped memory for tpu_custom_call.1']
  %s0 = inlined_call_operand.vmem [shape: f32[128,32], index: 0, kind: input, shape index: {}]
  %s1 = inlined_call_operand.vmem [shape: f32[36,32], index: 1, kind: input, shape index: {}]
  %s2 = inlined_call_operand.vmem [shape: f32[36,1], index: 2, kind: input, shape index: {}]
  %s3 = inlined_call_operand.vmem [shape: f32[36,36], index: 3, kind: input, shape index: {}]
  %s4 = inlined_call_operand.vmem [shape: f32[36,1], index: 4, kind: input, shape index: {}]
  %s5 = inlined_call_operand.vmem [shape: f32[18,36], index: 5, kind: input, shape index: {}]
  %s6 = inlined_call_operand.vmem [shape: f32[18,1], index: 6, kind: input, shape index: {}]
  %s7 = inlined_call_operand.vmem [shape: f32[1,18], index: 7, kind: input, shape index: {}]
  %s8 = inlined_call_operand.<no memory space> [shape: f32[1,1], index: 8, kind: input, shape index: {}]
  %s9 = inlined_call_operand.hbm [shape: f32[1,1,128], index: 9, kind: output, shape index: {}]
  %s10 = sld [smem:[#allocation0]]
  $region46: #{tpu_custom_call.1} parent=0
    _
  %s12 = ssub.s32 1, %s10
  %s13 = scalar_select 0, %s12, %s10
  %v14 = vstv %s8
  %15 = vst [vmem:[#allocation2] sm:$0x1] %v14
  $region1: #{tpu_custom_call.1} parent=0
    #allocation3 [shape = 'u8[512]{0}', space=vmem, size = 0x400, scoped, tag = 'output window, operand 0, single buffered']
    #allocation4 [shape = 's32[1]{0}', space=sflag, size = 0x4, scoped, tag = 'scoped memory for tpu_custom_call.1']
    %16 = vsyncpa [#allocation4], 0
    // Predicated region
    $region2: #{tpu_custom_call.1} parent=1 // pred_check
      _
    $region3: #{tpu_custom_call.1} parent=1 // pred_check_branch
      %18 = sbr.rel (0) target = $region5
    $region4: #{tpu_custom_call.1} parent=1 // pred_region
      _
    $region5: #{tpu_custom_call.1} parent=1 // pred_fallthru
      _
    // Predicated region
    $region6: #{tpu_custom_call.1} parent=1 // pred_check
      _
    $region7: #{tpu_custom_call.1} parent=1 // pred_check_branch
      %20 = sbr.rel (0) target = $region9
    $region8: #{tpu_custom_call.1} parent=1 // pred_region
      _
    $region9: #{tpu_custom_call.1} parent=1 // pred_fallthru
      _
    // Predicated region
    $region10: #{tpu_custom_call.1} parent=1 // pred_check
      _
    $region11: #{tpu_custom_call.1} parent=1 // pred_check_branch
      %22 = sbr.rel (0) target = $region13
    $region12: #{tpu_custom_call.1} parent=1 // pred_region
      _
    $region13: #{tpu_custom_call.1} parent=1 // pred_fallthru
      _
    // Predicated region
    $region14: #{tpu_custom_call.1} parent=1 // pred_check
      _
    $region15: #{tpu_custom_call.1} parent=1 // pred_check_branch
      %24 = sbr.rel (0) target = $region17
    $region16: #{tpu_custom_call.1} parent=1 // pred_region
      _
    $region17: #{tpu_custom_call.1} parent=1 // pred_fallthru
      _
    // Predicated region
    $region18: #{tpu_custom_call.1} parent=1 // pred_check
      _
    $region19: #{tpu_custom_call.1} parent=1 // pred_check_branch
      %26 = sbr.rel (0) target = $region21
    $region20: #{tpu_custom_call.1} parent=1 // pred_region
      _
    $region21: #{tpu_custom_call.1} parent=1 // pred_fallthru
      _
    // Predicated region
    $region22: #{tpu_custom_call.1} parent=1 // pred_check
      _
    $region23: #{tpu_custom_call.1} parent=1 // pred_check_branch
      %28 = sbr.rel (0) target = $region25
    $region24: #{tpu_custom_call.1} parent=1 // pred_region
      _
    $region25: #{tpu_custom_call.1} parent=1 // pred_fallthru
      _
    // Predicated region
    $region26: #{tpu_custom_call.1} parent=1 // pred_check
      _
    $region27: #{tpu_custom_call.1} parent=1 // pred_check_branch
      %30 = sbr.rel (0) target = $region29
    $region28: #{tpu_custom_call.1} parent=1 // pred_region
      _
    $region29: #{tpu_custom_call.1} parent=1 // pred_fallthru
      _
    // Predicated region
    $region30: #{tpu_custom_call.1} parent=1 // pred_check
      _
    $region31: #{tpu_custom_call.1} parent=1 // pred_check_branch
      %32 = sbr.rel (0) target = $region33
    $region32: #{tpu_custom_call.1} parent=1 // pred_region
      _
    $region33: #{tpu_custom_call.1} parent=1 // pred_fallthru
      _
    // Predicated region
    $region34: #{tpu_custom_call.1} parent=1 // pred_check
      _
    $region35: #{tpu_custom_call.1} parent=1 // pred_check_branch
      %34 = sbr.rel (0) target = $region37
    $region36: #{tpu_custom_call.1} parent=1 // pred_region
      _
    $region37: #{tpu_custom_call.1} parent=1 // pred_fallthru
      _
    %v35 = vld [vmem:[%s0] sm:$0xff]
    %v36 = vld [vmem:[%s0 + $0x8] sm:$0xff]
    %v37 = vld [vmem:[%s0 + $0x10] sm:$0xff]
    %v38 = vld [vmem:[%s0 + $0x18] sm:$0xff]
    %v39 = vld [vmem:[%s0 + $0x20] sm:$0xff]
    %v40 = vld [vmem:[%s0 + $0x28] sm:$0xff]
    %v41 = vld [vmem:[%s0 + $0x30] sm:$0xff]
    %v42 = vld [vmem:[%s0 + $0x38] sm:$0xff]
    %v43 = vld [vmem:[%s0 + $0x40] sm:$0xff]
    %v44 = vld [vmem:[%s0 + $0x48] sm:$0xff]
    %v45 = vld [vmem:[%s0 + $0x50] sm:$0xff]
    %v46 = vld [vmem:[%s0 + $0x58] sm:$0xff]
    %v47 = vld [vmem:[%s0 + $0x60] sm:$0xff]
    %v48 = vld [vmem:[%s0 + $0x68] sm:$0xff]
    %v49 = vld [vmem:[%s0 + $0x70] sm:$0xff]
    %v50 = vld [vmem:[%s0 + $0x78] sm:$0xff]
    %v51 = vld [vmem:[%s1] sm:$0xff]
    %v52 = vld [vmem:[%s1 + $0x8] sm:$0xff]
    %v53 = vld [vmem:[%s1 + $0x10] sm:$0xff]
    %v54 = vld [vmem:[%s1 + $0x18] sm:$0xff]
    %v55 = vld [vmem:[%s1 + $0x20] sm:$0xf]
    %v56 = vld [vmem:[%s2] sm:$0xff]
    %v57 = vld [vmem:[%s2 + $0x8] sm:$0xff]
    %v58 = vld [vmem:[%s2 + $0x10] sm:$0xff]
    %v59 = vld [vmem:[%s2 + $0x18] sm:$0xff]
    %v60 = vld [vmem:[%s2 + $0x20] sm:$0xf]
    %62 = vset.pattern.permute.xlu0 0
    %63 = vperm.xlu0 %62, %v56
    %v64 = vpop.permute.xlu0 %63
    %67 = vset.pattern.permute.xlu0 0
    %68 = vperm.xlu0 %67, %v57
    %v69 = vpop.permute.xlu0 %68
    %72 = vset.pattern.permute.xlu0 0
    %73 = vperm.xlu0 %72, %v58
    %v74 = vpop.permute.xlu0 %73
    %77 = vset.pattern.permute.xlu0 0
    %78 = vperm.xlu0 %77, %v59
    %v79 = vpop.permute.xlu0 %78
    %82 = vset.pattern.permute.xlu0 0
    %83 = vperm.xlu0 %82, %v60
    %v84 = vpop.permute.xlu0 %83
    %vm86 = vcmask 261120
    %v88 = vsel %vm86, %v51, 0
    %v91 = vsel %vm86, %v52, 0
    %v94 = vsel %vm86, %v53, 0
    %v97 = vsel %vm86, %v54, 0
    %v100 = vsel %vm86, %v55, 0
    %v103 = vsel %vm86, %v35, 0
    %v106 = vsel %vm86, %v36, 0
    %v109 = vsel %vm86, %v37, 0
    %v112 = vsel %vm86, %v38, 0
    %v115 = vsel %vm86, %v39, 0
    %v118 = vsel %vm86, %v40, 0
    %v121 = vsel %vm86, %v41, 0
    %v124 = vsel %vm86, %v42, 0
    %v127 = vsel %vm86, %v43, 0
    %v130 = vsel %vm86, %v44, 0
    %v133 = vsel %vm86, %v45, 0
    %v136 = vsel %vm86, %v46, 0
    %v139 = vsel %vm86, %v47, 0
    %v142 = vsel %vm86, %v48, 0
    %v145 = vsel %vm86, %v49, 0
    %v148 = vsel %vm86, %v50, 0
    %150 = vmatprep.subr.mxu0 0.0
    %151 = vmatpush1.xpose.msra.mxu0 %v148
    %152 = vmatprep.subr.mxu0 0.0
    %153 = vmatpush1.xpose.msra.mxu0 %v145
    %154 = vmatprep.subr.mxu0 0.0
    %155 = vmatpush1.xpose.msra.mxu0 %v142
    %156 = vmatprep.subr.mxu0 0.0
    %157 = vmatpush1.xpose.msra.mxu0 %v139
    %158 = vmatprep.subr.mxu0 0.0
    %159 = vmatpush1.xpose.msra.mxu0 %v136
    %160 = vmatprep.subr.mxu0 0.0
    %161 = vmatpush1.xpose.msra.mxu0 %v133
    %162 = vmatprep.subr.mxu0 0.0
    %163 = vmatpush1.xpose.msra.mxu0 %v130
    %164 = vmatprep.subr.mxu0 0.0
    %165 = vmatpush1.xpose.msra.mxu0 %v127
    %166 = vmatprep.subr.mxu0 0.0
    %167 = vmatpush1.xpose.msra.mxu0 %v124
    %168 = vmatprep.subr.mxu0 0.0
    %169 = vmatpush1.xpose.msra.mxu0 %v121
    %170 = vmatprep.subr.mxu0 0.0
    %171 = vmatpush1.xpose.msra.mxu0 %v118
    %172 = vmatprep.subr.mxu0 0.0
    %173 = vmatpush1.xpose.msra.mxu0 %v115
    %174 = vmatprep.subr.mxu0 0.0
    %175 = vmatpush1.xpose.msra.mxu0 %v112
    %176 = vmatprep.subr.mxu0 0.0
    %177 = vmatpush1.xpose.msra.mxu0 %v109
    %178 = vmatprep.subr.mxu0 0.0
    %179 = vmatpush1.xpose.msra.mxu0 %v106
    %180 = vmatprep.subr.mxu0 0.0
    %181 = vmatpush1.xpose.msra.mxu0 %v103
    %182 = vmatprep.subr.mxu0 0.0
    %183 = vmatpush2.xpose.msra.mxu0 0.0
    %184 = vmatprep.subr.mxu0 0.0
    %185 = vmatpush2.xpose.msra.mxu0 0.0
    %186 = vmatprep.subr.mxu0 0.0
    %187 = vmatpush2.xpose.msra.mxu0 0.0
    %188 = vmatprep.subr.mxu0 0.0
    %189 = vmatpush2.xpose.msra.mxu0 0.0
    %190 = vmatprep.subr.mxu0 0.0
    %191 = vmatpush2.xpose.msra.mxu0 0.0
    %192 = vmatprep.subr.mxu0 0.0
    %193 = vmatpush2.xpose.msra.mxu0 0.0
    %194 = vmatprep.subr.mxu0 0.0
    %195 = vmatpush2.xpose.msra.mxu0 0.0
    %196 = vmatprep.subr.mxu0 0.0
    %197 = vmatpush2.xpose.msra.mxu0 0.0
    %198 = vmatprep.subr.mxu0 0.0
    %199 = vmatpush2.xpose.msra.mxu0 0.0
    %200 = vmatprep.subr.mxu0 0.0
    %201 = vmatpush2.xpose.msra.mxu0 0.0
    %202 = vmatprep.subr.mxu0 0.0
    %203 = vmatpush2.xpose.msra.mxu0 0.0
    %204 = vmatprep.subr.mxu0 0.0
    %205 = vmatpush2.xpose.msra.mxu0 0.0
    %206 = vmatprep.subr.mxu0 0.0
    %207 = vmatpush2.xpose.msra.mxu0 0.0
    %208 = vmatprep.subr.mxu0 0.0
    %209 = vmatpush2.xpose.msra.mxu0 0.0
    %210 = vmatprep.subr.mxu0 0.0
    %211 = vmatpush2.xpose.msra.mxu0 0.0
    %212 = vmatprep.subr.mxu0 0.0
    %213 = vmatpush2.xpose.msra.mxu0 0.0
    %214 = vmatprep.mubr.f32.mxu0 0.0
    %215 = vmatmul.mubr.f32.gmra.mxu0 %v88
    %v216 = vpop.f32.mrf.mxu0
    %v217 = vadd.f32 %v64, %v216
    %v218 = vpop.f32.mrf.mxu0
    %219 = vmatprep.mubr.f32.mxu0 0.0
    %220 = vmatmul.mubr.f32.gmra.mxu0 %v91
    %v221 = vpop.f32.mrf.mxu0
    %v222 = vadd.f32 %v69, %v221
    %v223 = vpop.f32.mrf.mxu0
    %224 = vmatprep.mubr.f32.mxu0 0.0
    %225 = vmatmul.mubr.f32.gmra.mxu0 %v94
    %v226 = vpop.f32.mrf.mxu0
    %v227 = vadd.f32 %v74, %v226
    %v228 = vpop.f32.mrf.mxu0
    %229 = vmatprep.mubr.f32.mxu0 0.0
    %230 = vmatmul.mubr.f32.gmra.mxu0 %v97
    %v231 = vpop.f32.mrf.mxu0
    %v232 = vadd.f32 %v79, %v231
    %v233 = vpop.f32.mrf.mxu0
    %234 = vmatprep.mubr.f32.mxu0 0.0
    %235 = vmatmul.mubr.f32.gmra.mxu0 %v100
    %v236 = vpop.f32.mrf.mxu0
    %v237 = vadd.f32 %v84, %v236
    %v238 = vpop.f32.mrf.mxu0
    %239 = vdwg.mxu0
    %v240 = vmax.f32 %v217, 0.0
    %v241 = vmax.f32 %v222, 0.0
    %v242 = vmax.f32 %v227, 0.0
    %v243 = vmax.f32 %v232, 0.0
    %v244 = vmax.f32 %v237, 0.0
    %v245 = vld [vmem:[%s3] sm:$0xff]
    %v246 = vld [vmem:[%s3 + $0x8] sm:$0xff]
    %v247 = vld [vmem:[%s3 + $0x10] sm:$0xff]
    %v248 = vld [vmem:[%s3 + $0x18] sm:$0xff]
    %v249 = vld [vmem:[%s3 + $0x20] sm:$0xf]
    %v250 = vld [vmem:[%s4] sm:$0xff]
    %v251 = vld [vmem:[%s4 + $0x8] sm:$0xff]
    %v252 = vld [vmem:[%s4 + $0x10] sm:$0xff]
    %v253 = vld [vmem:[%s4 + $0x18] sm:$0xff]
    %v254 = vld [vmem:[%s4 + $0x20] sm:$0xf]
    %256 = vset.pattern.permute.xlu0 0
    %257 = vperm.xlu0 %256, %v250
    %v258 = vpop.permute.xlu0 %257
    %261 = vset.pattern.permute.xlu0 0
    %262 = vperm.xlu0 %261, %v251
    %v263 = vpop.permute.xlu0 %262
    %266 = vset.pattern.permute.xlu0 0
    %267 = vperm.xlu0 %266, %v252
    %v268 = vpop.permute.xlu0 %267
    %271 = vset.pattern.permute.xlu0 0
    %272 = vperm.xlu0 %271, %v253
    %v273 = vpop.permute.xlu0 %272
    %276 = vset.pattern.permute.xlu0 0
    %277 = vperm.xlu0 %276, %v254
    %v278 = vpop.permute.xlu0 %277
    %vm280 = vcmask 293888
    %v282 = vsel %vm280, %v245, 0
    %v285 = vsel %vm280, %v246, 0
    %v288 = vsel %vm280, %v247, 0
    %v291 = vsel %vm280, %v248, 0
    %v294 = vsel %vm280, %v249, 0
    %vm296 = vcmask 1043456
    %v298 = vsel %vm296, %v244, 0
    %300 = vmatprep.subr.mxu0 0.0
    %301 = vmatpush1.msra.mxu0 0.0
    %302 = vmatprep.subr.mxu0 0.0
    %303 = vmatpush1.msra.mxu0 0.0
    %304 = vmatprep.subr.mxu0 0.0
    %305 = vmatpush1.msra.mxu0 0.0
    %306 = vmatprep.subr.mxu0 0.0
    %307 = vmatpush1.msra.mxu0 0.0
    %308 = vmatprep.subr.mxu0 0.0
    %309 = vmatpush1.msra.mxu0 0.0
    %310 = vmatprep.subr.mxu0 0.0
    %311 = vmatpush1.msra.mxu0 0.0
    %312 = vmatprep.subr.mxu0 0.0
    %313 = vmatpush1.msra.mxu0 0.0
    %314 = vmatprep.subr.mxu0 0.0
    %315 = vmatpush1.msra.mxu0 0.0
    %316 = vmatprep.subr.mxu0 0.0
    %317 = vmatpush1.msra.mxu0 0.0
    %318 = vmatprep.subr.mxu0 0.0
    %319 = vmatpush1.msra.mxu0 0.0
    %320 = vmatprep.subr.mxu0 0.0
    %321 = vmatpush1.msra.mxu0 0.0
    %322 = vmatprep.subr.mxu0 0.0
    %323 = vmatpush1.msra.mxu0 %v298
    %324 = vmatprep.subr.mxu0 0.0
    %325 = vmatpush1.msra.mxu0 %v243
    %326 = vmatprep.subr.mxu0 0.0
    %327 = vmatpush1.msra.mxu0 %v242
    %328 = vmatprep.subr.mxu0 0.0
    %329 = vmatpush1.msra.mxu0 %v241
    %330 = vmatprep.subr.mxu0 0.0
    %331 = vmatpush1.msra.mxu0 %v240
    %332 = vmatprep.subr.mxu0 0.0
    %333 = vmatpush2.msra.mxu0 0.0
    %334 = vmatprep.subr.mxu0 0.0
    %335 = vmatpush2.msra.mxu0 0.0
    %336 = vmatprep.subr.mxu0 0.0
    %337 = vmatpush2.msra.mxu0 0.0
    %338 = vmatprep.subr.mxu0 0.0
    %339 = vmatpush2.msra.mxu0 0.0
    %340 = vmatprep.subr.mxu0 0.0
    %341 = vmatpush2.msra.mxu0 0.0
    %342 = vmatprep.subr.mxu0 0.0
    %343 = vmatpush2.msra.mxu0 0.0
    %344 = vmatprep.subr.mxu0 0.0
    %345 = vmatpush2.msra.mxu0 0.0
    %346 = vmatprep.subr.mxu0 0.0
    %347 = vmatpush2.msra.mxu0 0.0
    %348 = vmatprep.subr.mxu0 0.0
    %349 = vmatpush2.msra.mxu0 0.0
    %350 = vmatprep.subr.mxu0 0.0
    %351 = vmatpush2.msra.mxu0 0.0
    %352 = vmatprep.subr.mxu0 0.0
    %353 = vmatpush2.msra.mxu0 0.0
    %354 = vmatprep.subr.mxu0 0.0
    %355 = vmatpush2.msra.mxu0 0.0
    %356 = vmatprep.subr.mxu0 0.0
    %357 = vmatpush2.msra.mxu0 0.0
    %358 = vmatprep.subr.mxu0 0.0
    %359 = vmatpush2.msra.mxu0 0.0
    %360 = vmatprep.subr.mxu0 0.0
    %361 = vmatpush2.msra.mxu0 0.0
    %362 = vmatprep.subr.mxu0 0.0
    %363 = vmatpush2.msra.mxu0 0.0
    %364 = vmatprep.mubr.f32.mxu0 0.0
    %365 = vmatmul.mubr.f32.gmra.mxu0 %v282
    %v366 = vpop.f32.mrf.mxu0
    %v367 = vadd.f32 %v258, %v366
    %v368 = vpop.f32.mrf.mxu0
    %369 = vmatprep.mubr.f32.mxu0 0.0
    %370 = vmatmul.mubr.f32.gmra.mxu0 %v285
    %v371 = vpop.f32.mrf.mxu0
    %v372 = vadd.f32 %v263, %v371
    %v373 = vpop.f32.mrf.mxu0
    %374 = vmatprep.mubr.f32.mxu0 0.0
    %375 = vmatmul.mubr.f32.gmra.mxu0 %v288
    %v376 = vpop.f32.mrf.mxu0
    %v377 = vadd.f32 %v268, %v376
    %v378 = vpop.f32.mrf.mxu0
    %379 = vmatprep.mubr.f32.mxu0 0.0
    %380 = vmatmul.mubr.f32.gmra.mxu0 %v291
    %v381 = vpop.f32.mrf.mxu0
    %v382 = vadd.f32 %v273, %v381
    %v383 = vpop.f32.mrf.mxu0
    %384 = vmatprep.mubr.f32.mxu0 0.0
    %385 = vmatmul.mubr.f32.gmra.mxu0 %v294
    %v386 = vpop.f32.mrf.mxu0
    %v387 = vadd.f32 %v278, %v386
    %v388 = vpop.f32.mrf.mxu0
    %389 = vdwg.mxu0
    %v390 = vmax.f32 %v367, 0.0
    %v391 = vmax.f32 %v372, 0.0
    %v392 = vmax.f32 %v377, 0.0
    %v393 = vmax.f32 %v382, 0.0
    %v394 = vmax.f32 %v387, 0.0
    %v395 = vld [vmem:[%s5] sm:$0xff]
    %v396 = vld [vmem:[%s5 + $0x8] sm:$0xff]
    %v397 = vld [vmem:[%s5 + $0x10] sm:$0x3]
    %v398 = vld [vmem:[%s6] sm:$0xff]
    %v399 = vld [vmem:[%s6 + $0x8] sm:$0xff]
    %v400 = vld [vmem:[%s6 + $0x10] sm:$0x3]
    %402 = vset.pattern.permute.xlu0 0
    %403 = vperm.xlu0 %402, %v398
    %v404 = vpop.permute.xlu0 %403
    %407 = vset.pattern.permute.xlu0 0
    %408 = vperm.xlu0 %407, %v399
    %v409 = vpop.permute.xlu0 %408
    %412 = vset.pattern.permute.xlu0 0
    %413 = vperm.xlu0 %412, %v400
    %v414 = vpop.permute.xlu0 %413
    %v417 = vsel %vm280, %v395, 0
    %v420 = vsel %vm280, %v396, 0
    %v423 = vsel %vm280, %v397, 0
    %v426 = vsel %vm296, %v394, 0
    %428 = vmatprep.subr.mxu0 0.0
    %429 = vmatpush1.msra.mxu0 0.0
    %430 = vmatprep.subr.mxu0 0.0
    %431 = vmatpush1.msra.mxu0 0.0
    %432 = vmatprep.subr.mxu0 0.0
    %433 = vmatpush1.msra.mxu0 0.0
    %434 = vmatprep.subr.mxu0 0.0
    %435 = vmatpush1.msra.mxu0 0.0
    %436 = vmatprep.subr.mxu0 0.0
    %437 = vmatpush1.msra.mxu0 0.0
    %438 = vmatprep.subr.mxu0 0.0
    %439 = vmatpush1.msra.mxu0 0.0
    %440 = vmatprep.subr.mxu0 0.0
    %441 = vmatpush1.msra.mxu0 0.0
    %442 = vmatprep.subr.mxu0 0.0
    %443 = vmatpush1.msra.mxu0 0.0
    %444 = vmatprep.subr.mxu0 0.0
    %445 = vmatpush1.msra.mxu0 0.0
    %446 = vmatprep.subr.mxu0 0.0
    %447 = vmatpush1.msra.mxu0 0.0
    %448 = vmatprep.subr.mxu0 0.0
    %449 = vmatpush1.msra.mxu0 0.0
    %450 = vmatprep.subr.mxu0 0.0
    %451 = vmatpush1.msra.mxu0 %v426
    %452 = vmatprep.subr.mxu0 0.0
    %453 = vmatpush1.msra.mxu0 %v393
    %454 = vmatprep.subr.mxu0 0.0
    %455 = vmatpush1.msra.mxu0 %v392
    %456 = vmatprep.subr.mxu0 0.0
    %457 = vmatpush1.msra.mxu0 %v391
    %458 = vmatprep.subr.mxu0 0.0
    %459 = vmatpush1.msra.mxu0 %v390
    %460 = vmatprep.subr.mxu0 0.0
    %461 = vmatpush2.msra.mxu0 0.0
    %462 = vmatprep.subr.mxu0 0.0
    %463 = vmatpush2.msra.mxu0 0.0
    %464 = vmatprep.subr.mxu0 0.0
    %465 = vmatpush2.msra.mxu0 0.0
    %466 = vmatprep.subr.mxu0 0.0
    %467 = vmatpush2.msra.mxu0 0.0
    %468 = vmatprep.subr.mxu0 0.0
    %469 = vmatpush2.msra.mxu0 0.0
    %470 = vmatprep.subr.mxu0 0.0
    %471 = vmatpush2.msra.mxu0 0.0
    %472 = vmatprep.subr.mxu0 0.0
    %473 = vmatpush2.msra.mxu0 0.0
    %474 = vmatprep.subr.mxu0 0.0
    %475 = vmatpush2.msra.mxu0 0.0
    %476 = vmatprep.subr.mxu0 0.0
    %477 = vmatpush2.msra.mxu0 0.0
    %478 = vmatprep.subr.mxu0 0.0
    %479 = vmatpush2.msra.mxu0 0.0
    %480 = vmatprep.subr.mxu0 0.0
    %481 = vmatpush2.msra.mxu0 0.0
    %482 = vmatprep.subr.mxu0 0.0
    %483 = vmatpush2.msra.mxu0 0.0
    %484 = vmatprep.subr.mxu0 0.0
    %485 = vmatpush2.msra.mxu0 0.0
    %486 = vmatprep.subr.mxu0 0.0
    %487 = vmatpush2.msra.mxu0 0.0
    %488 = vmatprep.subr.mxu0 0.0
    %489 = vmatpush2.msra.mxu0 0.0
    %490 = vmatprep.subr.mxu0 0.0
    %491 = vmatpush2.msra.mxu0 0.0
    %492 = vmatprep.mubr.f32.mxu0 0.0
    %493 = vmatmul.mubr.f32.gmra.mxu0 %v417
    %v494 = vpop.f32.mrf.mxu0
    %v495 = vadd.f32 %v404, %v494
    %v496 = vpop.f32.mrf.mxu0
    %497 = vmatprep.mubr.f32.mxu0 0.0
    %498 = vmatmul.mubr.f32.gmra.mxu0 %v420
    %v499 = vpop.f32.mrf.mxu0
    %v500 = vadd.f32 %v409, %v499
    %v501 = vpop.f32.mrf.mxu0
    %502 = vmatprep.mubr.f32.mxu0 0.0
    %503 = vmatmul.mubr.f32.gmra.mxu0 %v423
    %v504 = vpop.f32.mrf.mxu0
    %v505 = vadd.f32 %v414, %v504
    %v506 = vpop.f32.mrf.mxu0
    %507 = vdwg.mxu0
    %v508 = vmax.f32 %v495, 0.0
    %v509 = vmax.f32 %v500, 0.0
    %v510 = vmax.f32 %v505, 0.0
    %v511 = vld [vmem:[%s7] sm:$0x1]
    %v512 = vld [vmem:[#allocation2] sm:$0x1]
    %514 = vset.pattern.permute.xlu0 0
    %515 = vperm.xlu0 %514, %v512
    %v516 = vpop.permute.xlu0 %515
    %v518 = vlaneseq
    %v519 = vshrl.u32 %v518, 7
    %v520 = vsub.s32 0, %v519
    %v521 = vrot.slane %v516, %v520
    %vm522 = vcmask 146432
    %v524 = vsel %vm522, %v511, 0
    %vm526 = vcmask 1041408
    %v528 = vsel %vm526, %v510, 0
    %530 = vmatprep.subr.mxu0 0.0
    %531 = vmatpush1.msra.mxu0 0.0
    %532 = vmatprep.subr.mxu0 0.0
    %533 = vmatpush1.msra.mxu0 0.0
    %534 = vmatprep.subr.mxu0 0.0
    %535 = vmatpush1.msra.mxu0 0.0
    %536 = vmatprep.subr.mxu0 0.0
    %537 = vmatpush1.msra.mxu0 0.0
    %538 = vmatprep.subr.mxu0 0.0
    %539 = vmatpush1.msra.mxu0 0.0
    %540 = vmatprep.subr.mxu0 0.0
    %541 = vmatpush1.msra.mxu0 0.0
    %542 = vmatprep.subr.mxu0 0.0
    %543 = vmatpush1.msra.mxu0 0.0
    %544 = vmatprep.subr.mxu0 0.0
    %545 = vmatpush1.msra.mxu0 0.0
    %546 = vmatprep.subr.mxu0 0.0
    %547 = vmatpush1.msra.mxu0 0.0
    %548 = vmatprep.subr.mxu0 0.0
    %549 = vmatpush1.msra.mxu0 0.0
    %550 = vmatprep.subr.mxu0 0.0
    %551 = vmatpush1.msra.mxu0 0.0
    %552 = vmatprep.subr.mxu0 0.0
    %553 = vmatpush1.msra.mxu0 0.0
    %554 = vmatprep.subr.mxu0 0.0
    %555 = vmatpush1.msra.mxu0 0.0
    %556 = vmatprep.subr.mxu0 0.0
    %557 = vmatpush1.msra.mxu0 %v528
    %558 = vmatprep.subr.mxu0 0.0
    %559 = vmatpush1.msra.mxu0 %v509
    %560 = vmatprep.subr.mxu0 0.0
    %561 = vmatpush1.msra.mxu0 %v508
    %562 = vmatprep.subr.mxu0 0.0
    %563 = vmatpush2.msra.mxu0 0.0
    %564 = vmatprep.subr.mxu0 0.0
    %565 = vmatpush2.msra.mxu0 0.0
    %566 = vmatprep.subr.mxu0 0.0
    %567 = vmatpush2.msra.mxu0 0.0
    %568 = vmatprep.subr.mxu0 0.0
    %569 = vmatpush2.msra.mxu0 0.0
    %570 = vmatprep.subr.mxu0 0.0
    %571 = vmatpush2.msra.mxu0 0.0
    %572 = vmatprep.subr.mxu0 0.0
    %573 = vmatpush2.msra.mxu0 0.0
    %574 = vmatprep.subr.mxu0 0.0
    %575 = vmatpush2.msra.mxu0 0.0
    %576 = vmatprep.subr.mxu0 0.0
    %577 = vmatpush2.msra.mxu0 0.0
    %578 = vmatprep.subr.mxu0 0.0
    %579 = vmatpush2.msra.mxu0 0.0
    %580 = vmatprep.subr.mxu0 0.0
    %581 = vmatpush2.msra.mxu0 0.0
    %582 = vmatprep.subr.mxu0 0.0
    %583 = vmatpush2.msra.mxu0 0.0
    %584 = vmatprep.subr.mxu0 0.0
    %585 = vmatpush2.msra.mxu0 0.0
    %586 = vmatprep.subr.mxu0 0.0
    %587 = vmatpush2.msra.mxu0 0.0
    %588 = vmatprep.subr.mxu0 0.0
    %589 = vmatpush2.msra.mxu0 0.0
    %590 = vmatprep.subr.mxu0 0.0
    %591 = vmatpush2.msra.mxu0 0.0
    %592 = vmatprep.subr.mxu0 0.0
    %593 = vmatpush2.msra.mxu0 0.0
    %594 = vmatprep.mubr.f32.mxu0 0.0
    %595 = vmatmul.mubr.f32.gmra.mxu0 %v524
    %v596 = vpop.f32.mrf.mxu0
    %v597 = vadd.f32 %v521, %v596
    %v598 = vpop.f32.mrf.mxu0
    %599 = vdwg.mxu0
    %v600 = vsub.f32 0.0, %v597
    %v601 = vmul.f32 %v600, 1.442695
    %v602 = vpow.pop %v601
    %v603 = vadd.f32 %v602, 1.0
    %v604 = vrcp.pop %v603
    %v605 = vmul.f32 1.0, %v604
    %606 = vst [vmem:[#allocation3] sm:$0x1] %v605
    // Predicated region
    $region38: #{tpu_custom_call.1} parent=1 // pred_check
      _
    $region39: #{tpu_custom_call.1} parent=1 // pred_check_branch
      %608 = sbr.rel (0) target = $region41
    $region40: #{tpu_custom_call.1} parent=1 // pred_region
      %s610 = ssub.s32 16, 16
      %611 = vsyncadd [#allocation4], %s610
      %s613 = sshll.u32 [#allocation3], 4
      %s614 = int_to_ptr.vmem [resolvable:$true] %s613
      %616 = dma.vmem_to_hbm [thread:$0]  %s614, 16, %s9, [#allocation4]
    $region41: #{tpu_custom_call.1} parent=1 // pred_fallthru
      _
    // Predicated region
    $region42: #{tpu_custom_call.1} parent=1 // pred_check
      _
    $region43: #{tpu_custom_call.1} parent=1 // pred_check_branch
      %618 = sbr.rel (0) target = $region45
    $region44: #{tpu_custom_call.1} parent=1 // pred_region
      %619 = dma.done [#allocation4], 16
    $region45: #{tpu_custom_call.1} parent=1 // pred_fallthru
      _
    %620 = vsyncpa [#allocation4], 1

</llo_original>
